<compile_context>
chip_gen: v6e
topology: v6e:2x2x1
jax: 0.10.0
libtpu: 0.0.40
codegen_flags: <defaults>
</compile_context>

<pallas_src>
import functools

import jax
import jax.numpy as jnp
from jax.experimental import pallas as pl
from jax.experimental.pallas import tpu as pltpu


# ----------------------------------------------------------------------------
# Tiling helpers
# ----------------------------------------------------------------------------
def _pick_row_tile(rows: int, feat: int, dtype_bytes: int = 4,
                   budget_bytes: int = 2 << 20, cap: int = 1024) -> int:
    """Largest row tile that is a multiple of 8 (or the full row extent) and
    keeps a single (tm, feat) buffer within ~budget_bytes (the Pallas pipeline
    double-buffers on top of this)."""
    if rows <= 8:
        return rows
    by_budget = max(8, budget_bytes // (dtype_bytes * feat))
    tm = min(rows, cap, by_budget)
    tm -= tm % 8
    return max(tm, 8)


# ----------------------------------------------------------------------------
# Kernel 1: LayerNormalization (torch-style, unbiased std)
# ----------------------------------------------------------------------------
def _layernorm_kernel(x_ref, alpha_ref, bias_ref, o_ref, *, eps: float):
    x = x_ref[...]                                   # (TM, D) f32
    d = x.shape[-1]
    mean = jnp.mean(x, axis=-1, keepdims=True)
    xc = x - mean
    # torch.std default is the unbiased sample std (divide by N-1).
    var = jnp.sum(xc * xc, axis=-1, keepdims=True) / jnp.float32(d - 1)
    std = jnp.sqrt(var)
    y = alpha_ref[...] * xc / (std + eps) + bias_ref[...]
    o_ref[...] = y.astype(o_ref.dtype)


def layernorm_forward(x: jnp.ndarray, alpha: jnp.ndarray, bias: jnp.ndarray,
                      eps: float = 1e-6) -> jnp.ndarray:
    orig_shape = x.shape
    D = orig_shape[-1]
    R = x.size // D

    x2 = x.reshape(R, D)
    alpha2 = alpha.reshape(1, D).astype(x.dtype)
    bias2 = bias.reshape(1, D).astype(x.dtype)

    tm = _pick_row_tile(R, D)
    grid = (pl.cdiv(R, tm),)

    out = pl.pallas_call(
        functools.partial(_layernorm_kernel, eps=eps),
        out_shape=jax.ShapeDtypeStruct((R, D), x.dtype),
        grid_spec=pltpu.PrefetchScalarGridSpec(
            num_scalar_prefetch=0,
            grid=grid,
            in_specs=[
                pl.BlockSpec((tm, D), lambda i: (i, 0)),
                pl.BlockSpec((1, D), lambda i: (0, 0)),   # alpha (resident)
                pl.BlockSpec((1, D), lambda i: (0, 0)),   # bias  (resident)
            ],
            out_specs=pl.BlockSpec((tm, D), lambda i: (i, 0)),
        ),
        compiler_params=pltpu.CompilerParams(
            dimension_semantics=("parallel",),
            vmem_limit_bytes=32 << 20,
        ),
    )(x2, alpha2, bias2)

    return out.reshape(orig_shape)


# ----------------------------------------------------------------------------
# Kernel 2: residual add (dropout = identity at inference)
# ----------------------------------------------------------------------------
def _residual_add_kernel(x_ref, s_ref, o_ref):
    o_ref[...] = x_ref[...] + s_ref[...]


def residual_add_forward(x: jnp.ndarray, s: jnp.ndarray) -> jnp.ndarray:
    assert x.shape == s.shape
    orig_shape = x.shape
    N = x.size

    # Lane-dense view: last dim a multiple of 128 -> unmasked full vector stores.
    lanes = None
    for c in (2048, 1024, 512, 256, 128):
        if N % c == 0:
            lanes = c
            break
    if lanes is None:
        lanes = orig_shape[-1]        # fallback: natural (rows, D) view

    rows = N // lanes
    x2 = x.reshape(rows, lanes)
    s2 = s.reshape(rows, lanes)

    tm = _pick_row_tile(rows, lanes)
    grid = (pl.cdiv(rows, tm),)

    out = pl.pallas_call(
        _residual_add_kernel,
        out_shape=jax.ShapeDtypeStruct((rows, lanes), x.dtype),
        grid_spec=pltpu.PrefetchScalarGridSpec(
            num_scalar_prefetch=0,
            grid=grid,
            in_specs=[
                pl.BlockSpec((tm, lanes), lambda i: (i, 0)),
                pl.BlockSpec((tm, lanes), lambda i: (i, 0)),
            ],
            out_specs=pl.BlockSpec((tm, lanes), lambda i: (i, 0)),
        ),
        compiler_params=pltpu.CompilerParams(
            dimension_semantics=("parallel",),
            vmem_limit_bytes=32 << 20,
        ),
    )(x2, s2)

    return out.reshape(orig_shape)


# ----------------------------------------------------------------------------
# Full ResidualConnection forward
# ----------------------------------------------------------------------------
def residual_connection_forward(x: jnp.ndarray, sublayer, alpha: jnp.ndarray,
                                bias: jnp.ndarray, eps: float = 1e-6) -> jnp.ndarray:
    """x + dropout(sublayer(norm(x)))  with dropout in inference mode."""
    normed = layernorm_forward(x, alpha, bias, eps=eps)   # Pallas kernel 1
    s = sublayer(normed)                                  # arbitrary JAX callable
    return residual_add_forward(x, s)                     # Pallas kernel 2


# ----------------------------------------------------------------------------
# Test
# ----------------------------------------------------------------------------
if __name__ == "__main__":
    batch, seq, features = 2, 8, 32
    dropout_p = 0.1   # inference mode -> identity (kept for fidelity)
    eps = 1e-6

    key = jax.random.PRNGKey(0)
    k_x, k_a, k_b, k_w, k_wb = jax.random.split(key, 5)

    x = jax.random.normal(k_x, (batch, seq, features), dtype=jnp.float32)

    # LayerNormalization parameters (PyTorch init is ones/zeros; perturb
    # slightly so the affine path is actually exercised).
    alpha = jnp.ones((features,), jnp.float32) \
        + 0.1 * jax.random.normal(k_a, (features,), jnp.float32)
    bias = 0.1 * jax.random.normal(k_b, (features,), jnp.float32)

    # Example sublayer: a small linear projection, applied in plain JAX.  The
    # sublayer is an arbitrary callable argument of forward(), not part of the
    # module, so it stays outside the kernels.
    W = 0.1 * jax.random.normal(k_w, (features, features), jnp.float32)
    wb = 0.1 * jax.random.normal(k_wb, (features,), jnp.float32)
    sublayer = lambda t: jnp.dot(t, W) + wb

    out = residual_connection_forward(x, sublayer, alpha, bias, eps=eps)
    out = jax.block_until_ready(out)

    # Pure-JAX reference (same semantics as the PyTorch module in eval mode).
    mean = x.mean(axis=-1, keepdims=True)
    std = jnp.std(x, axis=-1, keepdims=True, ddof=1)      # unbiased, like torch
    normed_ref = alpha * (x - mean) / (std + eps) + bias
    ref = x + sublayer(normed_ref)

    assert out.shape == x.shape
    assert jnp.allclose(out, ref, atol=1e-5, rtol=1e-5), \
        float(jnp.max(jnp.abs(out - ref)))

    print("KERNEL_OK")
</pallas_src>

<mosaic_0001>
module attributes {stable_mosaic.version = 11 : i64} {
  func.func @_layernorm_kernel(%arg0: i32, %arg1: memref<16x32xf32, #tpu.memory_space<vmem>>, %arg2: memref<1x32xf32, #tpu.memory_space<vmem>>, %arg3: memref<1x32xf32, #tpu.memory_space<vmem>>, %arg4: memref<16x32xf32, #tpu.memory_space<vmem>>) attributes {dimension_semantics = [#tpu.dimension_semantics<parallel>], iteration_bounds = array<i64: 1>, scalar_prefetch = 0 : i64, scratch_operands = 0 : i64, tpu.core_type = #tpu.core_type<tc>, window_params = [{transform_indices = @transform_0, window_bounds = array<i64: 16, 32>}, {pipeline_mode = #tpu.pipeline_mode<synchronous>, transform_indices = @transform_1, window_bounds = array<i64: 1, 32>}, {pipeline_mode = #tpu.pipeline_mode<synchronous>, transform_indices = @transform_2, window_bounds = array<i64: 1, 32>}, {transform_indices = @transform_3, window_bounds = array<i64: 16, 32>}]} {
    %c0 = arith.constant 0 : index
    %c0_0 = arith.constant 0 : index
    %0 = vector.load %arg1[%c0, %c0_0] : memref<16x32xf32, #tpu.memory_space<vmem>>, vector<16x32xf32>
    %cst = arith.constant dense<0.000000e+00> : vector<16xf32>
    %1 = vector.multi_reduction <add>, %0, %cst [1] : vector<16x32xf32> to vector<16xf32>
    %2 = vector.shape_cast %1 : vector<16xf32> to vector<16x1xf32>
    %cst_1 = arith.constant 3.200000e+01 : f32
    %3 = vector.broadcast %cst_1 : f32 to vector<16x1xf32>
    %4 = arith.divf %2, %3 : vector<16x1xf32>
    %5 = vector.broadcast %4 : vector<16x1xf32> to vector<16x32xf32>
    %6 = arith.subf %0, %5 : vector<16x32xf32>
    %7 = arith.mulf %6, %6 : vector<16x32xf32>
    %cst_2 = arith.constant dense<0.000000e+00> : vector<16xf32>
    %8 = vector.multi_reduction <add>, %7, %cst_2 [1] : vector<16x32xf32> to vector<16xf32>
    %9 = vector.shape_cast %8 : vector<16xf32> to vector<16x1xf32>
    %cst_3 = arith.constant 3.100000e+01 : f32
    %10 = vector.broadcast %cst_3 : f32 to vector<16x1xf32>
    %11 = arith.divf %9, %10 : vector<16x1xf32>
    %12 = math.sqrt %11 : vector<16x1xf32>
    %c0_4 = arith.constant 0 : index
    %c0_5 = arith.constant 0 : index
    %13 = vector.load %arg2[%c0_4, %c0_5] : memref<1x32xf32, #tpu.memory_space<vmem>>, vector<1x32xf32>
    %14 = vector.broadcast %13 : vector<1x32xf32> to vector<16x32xf32>
    %15 = arith.mulf %14, %6 : vector<16x32xf32>
    %cst_6 = arith.constant 9.99999997E-7 : f32
    %16 = vector.broadcast %cst_6 : f32 to vector<16x1xf32>
    %17 = arith.addf %12, %16 : vector<16x1xf32>
    %18 = vector.broadcast %17 : vector<16x1xf32> to vector<16x32xf32>
    %19 = arith.divf %15, %18 : vector<16x32xf32>
    %c0_7 = arith.constant 0 : index
    %c0_8 = arith.constant 0 : index
    %20 = vector.load %arg3[%c0_7, %c0_8] : memref<1x32xf32, #tpu.memory_space<vmem>>, vector<1x32xf32>
    %21 = vector.broadcast %20 : vector<1x32xf32> to vector<16x32xf32>
    %22 = arith.addf %19, %21 : vector<16x32xf32>
    %c0_9 = arith.constant 0 : index
    %c0_10 = arith.constant 0 : index
    %23 = vector.load %arg4[%c0_9, %c0_10] : memref<16x32xf32, #tpu.memory_space<vmem>>, vector<16x32xf32>
    tpu.vector_store %arg4[%c0_9, %c0_10], %22 {strides = array<i32>} : memref<16x32xf32, #tpu.memory_space<vmem>>, vector<16x32xf32>,
    return
  }
  func.func @transform_0(%arg0: i32) -> (i32, i32) {
    %c0_i32 = arith.constant 0 : i32
    %c0_i32_0 = arith.constant 0 : i32
    return %arg0, %c0_i32 : i32, i32
  }
  func.func @transform_1(%arg0: i32) -> (i32, i32) {
    %c0_i32 = arith.constant 0 : i32
    %c0_i32_0 = arith.constant 0 : i32
    %c0_i32_1 = arith.constant 0 : i32
    return %c0_i32, %c0_i32_0 : i32, i32
  }
  func.func @transform_2(%arg0: i32) -> (i32, i32) {
    %c0_i32 = arith.constant 0 : i32
    %c0_i32_0 = arith.constant 0 : i32
    %c0_i32_1 = arith.constant 0 : i32
    return %c0_i32, %c0_i32_0 : i32, i32
  }
  func.func @transform_3(%arg0: i32) -> (i32, i32) {
    %c0_i32 = arith.constant 0 : i32
    %c0_i32_0 = arith.constant 0 : i32
    return %arg0, %c0_i32 : i32, i32
  }
}

</mosaic_0001>

<llo_original>
// kernel: tpu_custom_call.1
$region0: #{tpu_custom_call.1}
  #allocation0 [shape = 'u32[]', space=smem, size = 0x4, offset = 0x4, fixed_abs, tag = 'smem constant byte address 0x4 - core index']
  #allocation1 [shape = 'u32[144,128]{1,0:T(1,128)}', space=vmem, size = 0x12000, scoped, tag = 'internal scratch']
  %s0 = inlined_call_operand.hbm [shape: f32[16,32], index: 0, kind: input, shape index: {}]
  %s1 = inlined_call_operand.vmem [shape: f32[1,32], index: 1, kind: input, shape index: {}]
  %s2 = inlined_call_operand.vmem [shape: f32[1,32], index: 2, kind: input, shape index: {}]
  %s3 = inlined_call_operand.hbm [shape: f32[16,32], index: 3, kind: output, shape index: {}]
  %s4 = sld [smem:[#allocation0]]
  $region26: #{tpu_custom_call.1} parent=0
    _
  %s6 = ssub.s32 1, %s4
  %s7 = scalar_select 0, %s6, %s4
  $region1: #{tpu_custom_call.1} parent=0
    #allocation2 [shape = 'u8[8192]{0}', space=vmem, size = 0x2000, scoped, tag = 'input window, operand 0, single buffered']
    #allocation3 [shape = 's32[1]{0}', space=sflag, size = 0x4, scoped, tag = 'scoped memory for tpu_custom_call.1']
    #allocation4 [shape = 's32[1]{0}', space=sflag, size = 0x4, scoped, tag = 'scoped memory for tpu_custom_call.1']
    #allocation5 [shape = 'u8[8192]{0}', space=vmem, size = 0x2000, scoped, tag = 'output window, operand 0, single buffered']
    %8 = vsyncpa [#allocation3], 0
    %9 = vsyncpa [#allocation4], 0
    // Predicated region
    $region2: #{tpu_custom_call.1} parent=1 // pred_check
      _
    $region3: #{tpu_custom_call.1} parent=1 // pred_check_branch
      %11 = sbr.rel (0) target = $region5
    $region4: #{tpu_custom_call.1} parent=1 // pred_region
      %s13 = ssub.s32 256, 256
      %14 = vsyncadd [#allocation3], %s13
      %s15 = sshll.u32 [#allocation2], 4
      %s16 = int_to_ptr.vmem [resolvable:$true] %s15
      %21 = dma.hbm_to_vmem [thread:$0]  %s0, 256, %s16, [#allocation3], 128, 128, 8
    $region5: #{tpu_custom_call.1} parent=1 // pred_fallthru
      _
    // Predicated region
    $region6: #{tpu_custom_call.1} parent=1 // pred_check
      _
    $region7: #{tpu_custom_call.1} parent=1 // pred_check_branch
      %23 = sbr.rel (0) target = $region9
    $region8: #{tpu_custom_call.1} parent=1 // pred_region
      _
    $region9: #{tpu_custom_call.1} parent=1 // pred_fallthru
      _
    // Predicated region
    $region10: #{tpu_custom_call.1} parent=1 // pred_check
      _
    $region11: #{tpu_custom_call.1} parent=1 // pred_check_branch
      %25 = sbr.rel (0) target = $region13
    $region12: #{tpu_custom_call.1} parent=1 // pred_region
      _
    $region13: #{tpu_custom_call.1} parent=1 // pred_fallthru
      _
    // Predicated region
    $region14: #{tpu_custom_call.1} parent=1 // pred_check
      _
    $region15: #{tpu_custom_call.1} parent=1 // pred_check_branch
      %27 = sbr.rel (0) target = $region17
    $region16: #{tpu_custom_call.1} parent=1 // pred_region
      %28 = dma.done [#allocation3], 256
    $region17: #{tpu_custom_call.1} parent=1 // pred_fallthru
      _
    %v29 = vld [vmem:[#allocation2] sm:$0xff]
    %v30 = vld [vmem:[#allocation2 + $0x8] sm:$0xff]
    %vm31 = vcmask 261120
    %v32 = vsel %vm31, %v29, 0.0
    %33 = vadd.xlane.f32.xlu0 %v32
    %v34 = vpop.xlane.xlu0 %33
    %v35 = vsel %vm31, %v30, 0.0
    %36 = vadd.xlane.f32.xlu0 %v35
    %v37 = vpop.xlane.xlu0 %36
    %v38 = vrcp.pop 32.0
    %v39 = vmul.f32 %v34, %v38
    %v40 = vmul.f32 %v37, %v38
    %v41 = vsub.f32 %v29, %v39
    %v42 = vsub.f32 %v30, %v40
    %v43 = vmul.f32 %v41, %v41
    %v44 = vmul.f32 %v42, %v42
    %v45 = vsel %vm31, %v43, 0.0
    %46 = vadd.xlane.f32.xlu0 %v45
    %v47 = vpop.xlane.xlu0 %46
    %v48 = vsel %vm31, %v44, 0.0
    %49 = vadd.xlane.f32.xlu0 %v48
    %v50 = vpop.xlane.xlu0 %49
    %v51 = vrcp.pop 31.0
    %v52 = vmul.f32 %v47, %v51
    %v53 = vmul.f32 %v50, %v51
    %v54 = vrsqrt.pop %v52
    %v55 = vmul.f32 %v52, %v54
    %vm56 = vcmp.eq.f32.partialorder %v52, inf
    %v57 = vsel %vm56, %v52, %v55
    %vm58 = vcmp.eq.f32.partialorder %v52, 0.0
    %v59 = vand.u32 %v52, 2147483648
    %v60 = vsel %vm58, %v59, %v57
    %v61 = vrsqrt.pop %v53
    %v62 = vmul.f32 %v53, %v61
    %vm63 = vcmp.eq.f32.partialorder %v53, inf
    %v64 = vsel %vm63, %v53, %v62
    %vm65 = vcmp.eq.f32.partialorder %v53, 0.0
    %v66 = vand.u32 %v53, 2147483648
    %v67 = vsel %vm65, %v66, %v64
    %v68 = vld [vmem:[%s1] sm:$0x1]
    %v70 = vlaneseq
    %v71 = vshrl.u32 %v70, 7
    %v72 = vsub.s32 0, %v71
    %v73 = vrot.slane %v68, %v72
    %v75 = vmul.f32 %v73, %v41
    %v76 = vmul.f32 %v73, %v42
    %v77 = vadd.f32 %v60, 1e-06
    %v78 = vadd.f32 %v67, 1e-06
    %v79 = vrcp.pop %v77
    %v80 = vmul.f32 %v75, %v79
    %v81 = vrcp.pop %v78
    %v82 = vmul.f32 %v76, %v81
    %v83 = vld [vmem:[%s2] sm:$0x1]
    %v85 = vlaneseq
    %v86 = vshrl.u32 %v85, 7
    %v87 = vsub.s32 0, %v86
    %v88 = vrot.slane %v83, %v87
    %v90 = vadd.f32 %v80, %v88
    %v91 = vadd.f32 %v82, %v88
    %92 = vst.msk [vmem:[#allocation5] sm:$0xff] %vm31, %v90
    %93 = vst.msk [vmem:[#allocation5 + $0x8] sm:$0xff] %vm31, %v91
    // Predicated region
    $region18: #{tpu_custom_call.1} parent=1 // pred_check
      _
    $region19: #{tpu_custom_call.1} parent=1 // pred_check_branch
      %95 = sbr.rel (0) target = $region21
    $region20: #{tpu_custom_call.1} parent=1 // pred_region
      %s97 = ssub.s32 256, 256
      %98 = vsyncadd [#allocation4], %s97
      %s99 = sshll.u32 [#allocation5], 4
      %s100 = int_to_ptr.vmem [resolvable:$true] %s99
      %105 = dma.vmem_to_hbm [thread:$0]  %s100, 256, %s3, [#allocation4], 128, 128, 8
    $region21: #{tpu_custom_call.1} parent=1 // pred_fallthru
      _
    // Predicated region
    $region22: #{tpu_custom_call.1} parent=1 // pred_check
      _
    $region23: #{tpu_custom_call.1} parent=1 // pred_check_branch
      %107 = sbr.rel (0) target = $region25
    $region24: #{tpu_custom_call.1} parent=1 // pred_region
      %108 = dma.done [#allocation4], 256
    $region25: #{tpu_custom_call.1} parent=1 // pred_fallthru
      _
    %109 = vsyncpa [#allocation3], 1
    %110 = vsyncpa [#allocation4], 1

</llo_original>
